<compile_context>
chip_gen: v6e
topology: v6e:2x2x1
jax: 0.10.0
libtpu: 0.0.40
codegen_flags: <defaults>
</compile_context>

<pallas_src>
import math

import jax
import jax.numpy as jnp
from jax.experimental import pallas as pl
from jax.experimental.pallas import tpu as pltpu


def make_positional_encoding(d_model: int, max_len: int = 16) -> jnp.ndarray:
    """Deterministic sinusoidal table, matches the torch __init__ exactly.

    Returns pe of shape (max_len, d_model), float32.  Assumes d_model is even
    (same assumption as the torch module).
    """
    position = jnp.arange(0, max_len, dtype=jnp.float32)[:, None]          # (L, 1)
    div_term = jnp.exp(
        jnp.arange(0, d_model, 2, dtype=jnp.float32)
        * (-math.log(10000.0) / d_model)
    )                                                                       # (D/2,)
    angles = position * div_term                                            # (L, D/2)
    pe = jnp.zeros((max_len, d_model), dtype=jnp.float32)
    pe = pe.at[:, 0::2].set(jnp.sin(angles))
    pe = pe.at[:, 1::2].set(jnp.cos(angles))
    return pe


def _pe_add_kernel(x_ref, pe_ref, o_ref):
    # (T, TW) + (1, TW): the size-1 sublane operand lowers to a sublane
    # broadcast read (no materialized (T, TW) VMEM temp).  If a future dump
    # ever shows a temp, switch to pe_ref[pl.ds(0, T, stride=0), :].
    o_ref[...] = (x_ref[...] + pe_ref[...]).astype(o_ref.dtype)


def _round_up(n: int, m: int) -> int:
    return ((n + m - 1) // m) * m


_SMALL_PROBLEM_BYTES = 256 * 1024       # below this, launch overhead dominates
_VMEM_BUDGET_BYTES = 8 * 1024 * 1024    # in+out, double-buffered; v5e-safe


def positional_encoding_forward(
    x: jnp.ndarray, pe_full: jnp.ndarray, *, force_pallas: bool = False
) -> jnp.ndarray:
    """x: (B, S, D); pe_full: (max_len, D) float32. Returns x + pe[:S] (broadcast over B)."""
    B, S, D = x.shape
    W = S * D
    itemsize = jnp.dtype(x.dtype).itemsize

    # Small-problem fallback: the shipped (2, 8, 32) case is 8 KiB; a custom
    # call there is 100% dispatch overhead, so let XLA fuse the add.
    if (B * W * itemsize) < _SMALL_PROBLEM_BYTES and not force_pallas:
        return x + pe_full[None, :S, :].astype(x.dtype)

    # Flatten to a lane-dense 2-D layout; pe becomes one (1, W) row in x's
    # dtype so there is no implicit up/down-cast inside the kernel.
    # NOTE: for bf16 inputs this rounds slightly differently from torch's
    # f32-promoted add (negligible for positional encodings).
    x2 = x.reshape(B, W)
    pe = pe_full[:S, :].reshape(1, W).astype(x.dtype)

    # Minimum legal sublane tile per dtype packing: f32 -> 8, bf16/f16 -> 16,
    # int8/fp8 -> 32.
    sub = 8 if itemsize >= 4 else (16 if itemsize == 2 else 32)

    # Width tiling fallback: only when even a `sub`-row block of the full width
    # would blow the VMEM budget (very large S*D).  Width blocks are multiples
    # of 128 to keep stores unmasked except on the final partial block.
    if sub * W * itemsize * 4 > _VMEM_BUDGET_BYTES and W > 128:
        TW = max(128, ((_VMEM_BUDGET_BYTES // (4 * sub * itemsize)) // 128) * 128)
        TW = min(TW, W)
    else:
        TW = W
    n_w = pl.cdiv(W, TW)

    # Row tiling: largest multiple of `sub` that keeps the double-buffered
    # in+out blocks under budget, but ALWAYS >= 2 balanced (even-count) tiles
    # when there are enough rows, so v7x's two TensorCores both get work.
    per_row_bytes = TW * itemsize
    t_budget = max(sub, (_VMEM_BUDGET_BYTES // (4 * per_row_bytes) // sub) * sub)
    if B < 2 * sub:
        T = B                           # too few rows to split; full-dim block is legal
    else:
        n_r = max(2, pl.cdiv(B, t_budget))
        n_r += n_r % 2                  # even tile count -> balanced megacore split
        T = _round_up(pl.cdiv(B, n_r), sub)
    n_r = pl.cdiv(B, T)

    out = pl.pallas_call(
        _pe_add_kernel,
        out_shape=jax.ShapeDtypeStruct((B, W), x.dtype),
        grid=(n_r, n_w),
        in_specs=[
            pl.BlockSpec((T, TW), lambda i, j: (i, j)),   # row/width tiles of x
            pl.BlockSpec((1, TW), lambda i, j: (0, j)),   # resident PE row
        ],
        out_specs=pl.BlockSpec((T, TW), lambda i, j: (i, j)),
        # No input_output_aliases: x (pre-reshape) is usually still live in the
        # caller, and honouring an alias would force XLA to emit a full
        # defensive copy of x (an extra hidden read+write of the whole array).
        compiler_params=pltpu.CompilerParams(
            # TODO(synk): if an xprof trace on v7x ever shows one idle
            # TensorCore despite "parallel", switch the row axis to
            # pltpu.CORE_PARALLEL.
            dimension_semantics=("parallel", "parallel"),
        ),
    )(x2, pe)

    return out.reshape(B, S, D)


if __name__ == "__main__":
    # Small shapes consistent with the module: batch=2, seq=8 (<= max_len=16),
    # d_model=32.
    B, S, D = 2, 8, 32
    max_len = 16

    key_small, key_big = jax.random.split(jax.random.PRNGKey(0))
    pe_full = make_positional_encoding(D, max_len)

    # 1) Shipped tiny shape, forced through the Pallas kernel (single block).
    x = jax.random.normal(key_small, (B, S, D), dtype=jnp.float32)
    out = jax.block_until_ready(
        positional_encoding_forward(x, pe_full, force_pallas=True)
    )
    ref = x + pe_full[None, :S, :]
    assert out.shape == (B, S, D)
    assert jnp.allclose(out, ref, atol=1e-6, rtol=1e-6)

    # 2) Default path for the tiny shape (fused XLA add, no custom call).
    out_fb = jax.block_until_ready(positional_encoding_forward(x, pe_full))
    assert jnp.allclose(out_fb, ref, atol=1e-6, rtol=1e-6)

    # 3) Moderately larger batch, forced through the kernel, exercising the
    #    2-tile "parallel" row split used for v7x megacore sharding.
    x_big = jax.random.normal(key_big, (32, S, D), dtype=jnp.float32)
    out_big = jax.block_until_ready(
        positional_encoding_forward(x_big, pe_full, force_pallas=True)
    )
    ref_big = x_big + pe_full[None, :S, :]
    assert jnp.allclose(out_big, ref_big, atol=1e-6, rtol=1e-6)

    print("KERNEL_OK")
</pallas_src>

<mosaic_0001>
module attributes {stable_mosaic.version = 11 : i64} {
  func.func @_pe_add_kernel(%arg0: i32, %arg1: i32, %arg2: memref<2x256xf32, #tpu.memory_space<vmem>>, %arg3: memref<1x256xf32, #tpu.memory_space<vmem>>, %arg4: memref<2x256xf32, #tpu.memory_space<vmem>>) attributes {dimension_semantics = [#tpu.dimension_semantics<parallel>, #tpu.dimension_semantics<parallel>], iteration_bounds = array<i64: 1, 1>, scalar_prefetch = 0 : i64, scratch_operands = 0 : i64, tpu.core_type = #tpu.core_type<tc>, window_params = [{transform_indices = @transform_0, window_bounds = array<i64: 2, 256>}, {transform_indices = @transform_1, window_bounds = array<i64: 1, 256>}, {transform_indices = @transform_2, window_bounds = array<i64: 2, 256>}]} {
    %c0 = arith.constant 0 : index
    %c0_0 = arith.constant 0 : index
    %0 = vector.load %arg2[%c0, %c0_0] : memref<2x256xf32, #tpu.memory_space<vmem>>, vector<2x256xf32>
    %c0_1 = arith.constant 0 : index
    %c0_2 = arith.constant 0 : index
    %1 = vector.load %arg3[%c0_1, %c0_2] : memref<1x256xf32, #tpu.memory_space<vmem>>, vector<1x256xf32>
    %2 = vector.broadcast %1 : vector<1x256xf32> to vector<2x256xf32>
    %3 = arith.addf %0, %2 : vector<2x256xf32>
    %c0_3 = arith.constant 0 : index
    %c0_4 = arith.constant 0 : index
    %4 = vector.load %arg4[%c0_3, %c0_4] : memref<2x256xf32, #tpu.memory_space<vmem>>, vector<2x256xf32>
    tpu.vector_store %arg4[%c0_3, %c0_4], %3 {strides = array<i32>} : memref<2x256xf32, #tpu.memory_space<vmem>>, vector<2x256xf32>,
    return
  }
  func.func @transform_0(%arg0: i32, %arg1: i32) -> (i32, i32) {
    %c0_i32 = arith.constant 0 : i32
    return %arg0, %arg1 : i32, i32
  }
  func.func @transform_1(%arg0: i32, %arg1: i32) -> (i32, i32) {
    %c0_i32 = arith.constant 0 : i32
    %c0_i32_0 = arith.constant 0 : i32
    return %c0_i32, %arg1 : i32, i32
  }
  func.func @transform_2(%arg0: i32, %arg1: i32) -> (i32, i32) {
    %c0_i32 = arith.constant 0 : i32
    return %arg0, %arg1 : i32, i32
  }
}

</mosaic_0001>

<llo_original>
// kernel: tpu_custom_call.1
$region0: #{tpu_custom_call.1}
  #allocation0 [shape = 'u32[]', space=smem, size = 0x4, offset = 0x4, fixed_abs, tag = 'smem constant byte address 0x4 - core index']
  #allocation1 [shape = 'u32[144,128]{1,0:T(1,128)}', space=vmem, size = 0x12000, scoped, tag = 'internal scratch']
  %s0 = inlined_call_operand.hbm [shape: f32[2,256], index: 0, kind: input, shape index: {}]
  %s1 = inlined_call_operand.hbm [shape: f32[1,256], index: 1, kind: input, shape index: {}]
  %s2 = inlined_call_operand.hbm [shape: f32[2,256], index: 2, kind: output, shape index: {}]
  %s3 = sld [smem:[#allocation0]]
  $region26: #{tpu_custom_call.1} parent=0
    _
  %s5 = ssub.s32 1, %s3
  %s6 = scalar_select 0, %s5, %s3
  $region1: #{tpu_custom_call.1} parent=0
    #allocation2 [shape = 'u8[2048]{0}', space=vmem, size = 0x800, scoped, tag = 'input window, operand 0, single buffered']
    #allocation3 [shape = 's32[1]{0}', space=sflag, size = 0x4, scoped, tag = 'scoped memory for tpu_custom_call.1']
    #allocation4 [shape = 's32[1]{0}', space=sflag, size = 0x4, scoped, tag = 'scoped memory for tpu_custom_call.1']
    #allocation5 [shape = 'u8[1024]{0}', space=vmem, size = 0x400, scoped, tag = 'input window, operand 1, single buffered']
    #allocation6 [shape = 's32[1]{0}', space=sflag, size = 0x4, scoped, tag = 'scoped memory for tpu_custom_call.1']
    #allocation7 [shape = 'u8[2048]{0}', space=vmem, size = 0x800, scoped, tag = 'output window, operand 0, single buffered']
    %7 = vsyncpa [#allocation3], 0
    %8 = vsyncpa [#allocation6], 0
    %9 = vsyncpa [#allocation4], 0
    // Predicated region
    $region2: #{tpu_custom_call.1} parent=1 // pred_check
      _
    $region3: #{tpu_custom_call.1} parent=1 // pred_check_branch
      %11 = sbr.rel (0) target = $region5
    $region4: #{tpu_custom_call.1} parent=1 // pred_region
      %s13 = ssub.s32 64, 64
      %14 = vsyncadd [#allocation3], %s13
      %s16 = sshll.u32 [#allocation2], 4
      %s17 = int_to_ptr.vmem [resolvable:$true] %s16
      %19 = dma.hbm_to_vmem [thread:$0]  %s0, 64, %s17, [#allocation3]
    $region5: #{tpu_custom_call.1} parent=1 // pred_fallthru
      _
    // Predicated region
    $region6: #{tpu_custom_call.1} parent=1 // pred_check
      _
    $region7: #{tpu_custom_call.1} parent=1 // pred_check_branch
      %21 = sbr.rel (0) target = $region9
    $region8: #{tpu_custom_call.1} parent=1 // pred_region
      %s23 = ssub.s32 32, 32
      %24 = vsyncadd [#allocation6], %s23
      %s26 = sshll.u32 [#allocation5], 4
      %s27 = int_to_ptr.vmem [resolvable:$true] %s26
      %29 = dma.hbm_to_vmem [thread:$0]  %s1, 32, %s27, [#allocation6]
    $region9: #{tpu_custom_call.1} parent=1 // pred_fallthru
      _
    // Predicated region
    $region10: #{tpu_custom_call.1} parent=1 // pred_check
      _
    $region11: #{tpu_custom_call.1} parent=1 // pred_check_branch
      %31 = sbr.rel (0) target = $region13
    $region12: #{tpu_custom_call.1} parent=1 // pred_region
      %32 = dma.done [#allocation3], 64
    $region13: #{tpu_custom_call.1} parent=1 // pred_fallthru
      _
    // Predicated region
    $region14: #{tpu_custom_call.1} parent=1 // pred_check
      _
    $region15: #{tpu_custom_call.1} parent=1 // pred_check_branch
      %34 = sbr.rel (0) target = $region17
    $region16: #{tpu_custom_call.1} parent=1 // pred_region
      %35 = dma.done [#allocation6], 32
    $region17: #{tpu_custom_call.1} parent=1 // pred_fallthru
      _
    %v36 = vld [vmem:[#allocation2] sm:$0xf]
    %v37 = vld [vmem:[#allocation5] sm:$0x3]
    %v39 = vlaneseq
    %v40 = vshrl.u32 %v39, 7
    %v41 = vsub.s32 0, %v40
    %v42 = vrot.slane %v37, %v41
    %v43 = vlaneseq
    %v44 = vshrl.u32 %v43, 7
    %v45 = vsub.s32 1, %v44
    %v46 = vrot.slane %v37, %v45
    %v47 = vcombine.low %v42, %v46
    %v49 = vunpack.c.l.s4 1983009808
    %v50 = vunpack.c.0.s8 %v49
    %v51 = vlaneseq
    %v52 = vshrl.u32 %v51, 7
    %v53 = vsub.s32 %v50, %v52
    %v54 = vrot.slane %v47, %v53
    %v56 = vadd.f32 %v36, %v54
    %57 = vst [vmem:[#allocation7] sm:$0xf] %v56
    // Predicated region
    $region18: #{tpu_custom_call.1} parent=1 // pred_check
      _
    $region19: #{tpu_custom_call.1} parent=1 // pred_check_branch
      %59 = sbr.rel (0) target = $region21
    $region20: #{tpu_custom_call.1} parent=1 // pred_region
      %s61 = ssub.s32 64, 64
      %62 = vsyncadd [#allocation4], %s61
      %s64 = sshll.u32 [#allocation7], 4
      %s65 = int_to_ptr.vmem [resolvable:$true] %s64
      %67 = dma.vmem_to_hbm [thread:$0]  %s65, 64, %s2, [#allocation4]
    $region21: #{tpu_custom_call.1} parent=1 // pred_fallthru
      _
    // Predicated region
    $region22: #{tpu_custom_call.1} parent=1 // pred_check
      _
    $region23: #{tpu_custom_call.1} parent=1 // pred_check_branch
      %69 = sbr.rel (0) target = $region25
    $region24: #{tpu_custom_call.1} parent=1 // pred_region
      %70 = dma.done [#allocation4], 64
    $region25: #{tpu_custom_call.1} parent=1 // pred_fallthru
      _
    %71 = vsyncpa [#allocation3], 1
    %72 = vsyncpa [#allocation6], 1
    %73 = vsyncpa [#allocation4], 1

</llo_original>
